<compile_context>
chip_gen: v7x
topology: tpu7x:2x2x1
jax: 0.10.0
libtpu: 0.0.40
codegen_flags: <defaults>
</compile_context>

<pallas_src>
import numpy as np
import jax
import jax.numpy as jnp
from jax.experimental import pallas as pl
from jax.experimental.pallas import tpu as pltpu


# ---------------------------------------------------------------------------
# Pallas kernel: complex channel mixing, accumulated over in_channels.
#   out[b, o, m] = sum_i x[b, i, m] * w[i, o, m]   (complex, split re/im)
# Refs:
#   xr/xi:            (I, B, TL)  real / imag of gathered Fourier modes
#   wr/wsum/wdiff:    (I, O, TL)  wr, wr+wi, wi-wr   (precomputed at init)
#   out (or/oi):      (B, O, TL)
# ---------------------------------------------------------------------------
def _spectral_mix_kernel(xr_ref, xi_ref, wr_ref, wsum_ref, wdiff_ref,
                         or_ref, oi_ref):
    I, B, TL = xr_ref.shape
    O = wr_ref.shape[1]

    def body(i, carry):
        acc_r, acc_i = carry
        xr = xr_ref[i]                        # (B, TL)
        xi = xi_ref[i]
        wr = wr_ref[i]                        # (O, TL)
        ws = wsum_ref[i]                      # wr + wi
        wd = wdiff_ref[i]                     # wi - wr
        xs = xr + xi                          # (B, TL)
        # Karatsuba complex multiply:
        #   out_r += xr*wr - xi*wi = k1 - k3
        #   out_i += xr*wi + xi*wr = k1 + k2
        k1 = xs[:, None, :] * wr[None, :, :]  # (B, O, TL)
        k2 = xr[:, None, :] * wd[None, :, :]
        k3 = xi[:, None, :] * ws[None, :, :]
        return acc_r + (k1 - k3), acc_i + (k1 + k2)

    init = (jnp.zeros((B, O, TL), jnp.float32),
            jnp.zeros((B, O, TL), jnp.float32))
    acc_r, acc_i = jax.lax.fori_loop(0, I, body, init, unroll=True)
    or_ref[...] = acc_r
    oi_ref[...] = acc_i


def spectral_channel_mix(xr, xi, wr, wsum, wdiff, *, tile_l, vmem_limit_bytes):
    """xr/xi: (I, B, Lp) f32; wr/wsum/wdiff: (I, O, Lp) f32 -> two (B, O, Lp) f32."""
    I, B, Lp = xr.shape
    O = wr.shape[1]
    n_l = Lp // tile_l

    x_spec = pl.BlockSpec((I, B, tile_l), lambda l: (0, 0, l))
    w_spec = pl.BlockSpec((I, O, tile_l), lambda l: (0, 0, l))
    o_spec = pl.BlockSpec((B, O, tile_l), lambda l: (0, 0, l))

    return pl.pallas_call(
        _spectral_mix_kernel,
        out_shape=(jax.ShapeDtypeStruct((B, O, Lp), jnp.float32),
                   jax.ShapeDtypeStruct((B, O, Lp), jnp.float32)),
        grid=(n_l,),
        in_specs=[x_spec, x_spec, w_spec, w_spec, w_spec],
        out_specs=(o_spec, o_spec),
        compiler_params=pltpu.CompilerParams(
            dimension_semantics=("parallel",),
            vmem_limit_bytes=vmem_limit_bytes),
    )(xr, xi, wr, wsum, wdiff)


# ---------------------------------------------------------------------------
# Generation-aware tiling helpers
# ---------------------------------------------------------------------------
def _vmem_config():
    """Returns (block budget bytes, vmem_limit_bytes). Safe fallback if no info."""
    try:
        cap = int(pltpu.get_tpu_info().vmem_capacity_bytes)
    except Exception:
        cap = 64 * 1024 * 1024                    # assume smallest (v7x per-core)
    scoped = min(cap // 2, 64 * 1024 * 1024)      # v5e/v6e -> 64 MiB, v7x -> 32 MiB
    budget = scoped // 2                          # headroom for pipeline internals
    return budget, scoped


def _choose_tile(l_pad, b, i, o, budget_bytes):
    """Largest multiple-of-128 lane tile that divides l_pad and fits the budget."""
    per_lane = 4 * (2 * (2 * i * b + 3 * i * o + 2 * b * o)   # dbl-buffered blocks
                    + 8 * b * o)                              # accumulators / temps
    max_tl = max(128, (budget_bytes // max(per_lane, 1)) // 128 * 128)
    if l_pad <= max_tl:
        return l_pad
    tl = max_tl
    while l_pad % tl != 0:
        tl -= 128
    return tl


# ---------------------------------------------------------------------------
# Module-equivalent wrapper
# ---------------------------------------------------------------------------
class SpectralConv3d:
    def __init__(self, in_channels, out_channels, modes1, modes2, modes3, key):
        self.in_channels = in_channels
        self.out_channels = out_channels
        self.modes1, self.modes2, self.modes3 = modes1, modes2, modes3
        scale = 1.0 / (in_channels * out_channels)
        shape = (in_channels, out_channels, modes1, modes2, modes3)

        keys = jax.random.split(key, 8)
        # torch.rand(..., dtype=cfloat): real & imag each uniform [0, 1)
        wr_corners, wi_corners = [], []
        for c in range(4):
            wr_corners.append(scale * jax.random.uniform(keys[2 * c], shape,
                                                         dtype=jnp.float32))
            wi_corners.append(scale * jax.random.uniform(keys[2 * c + 1], shape,
                                                         dtype=jnp.float32))
        self.w_corners = list(zip(wr_corners, wi_corners))    # for reference()

        M = modes1 * modes2 * modes3
        L = 4 * M
        L_pad = pl.cdiv(L, 128) * 128        # lane-align the folded mode axis

        def fold(ws):
            w = jnp.stack(ws, axis=2).reshape(in_channels, out_channels, L)
            if L_pad != L:
                w = jnp.pad(w, ((0, 0), (0, 0), (0, L_pad - L)))
            return w

        wr_f = fold(wr_corners)              # (I, O, L_pad)
        wi_f = fold(wi_corners)
        # Weight prep hoisted out of __call__; Karatsuba weight sums precomputed.
        self._wr = wr_f
        self._wsum = wr_f + wi_f
        self._wdiff = wi_f - wr_f

        self._M, self._L, self._L_pad = M, L, L_pad
        self._vmem_budget, self._vmem_limit = _vmem_config()

    def __call__(self, x):
        B = x.shape[0]
        I, O = self.in_channels, self.out_channels
        m1, m2, m3 = self.modes1, self.modes2, self.modes3
        D1, D2, D3 = x.shape[-3], x.shape[-2], x.shape[-1]
        Dz = D3 // 2 + 1
        M, L, L_pad = self._M, self._L, self._L_pad

        # ---- FFT (glue, plain JAX) ----
        x_ft = jnp.fft.rfftn(x.astype(jnp.float32), axes=(-3, -2, -1))  # (B,I,D1,D2,Dz)

        # ---- gather the 4 retained mode corners, fold corners into lanes ----
        corners = [
            x_ft[:, :, :m1, :m2, :m3],
            x_ft[:, :, -m1:, :m2, :m3],
            x_ft[:, :, :m1, -m2:, :m3],
            x_ft[:, :, -m1:, -m2:, :m3],
        ]
        xc = jnp.stack(corners, axis=2).reshape(B, I, L)     # (B, I, 4*M)
        xc = jnp.transpose(xc, (1, 0, 2))                    # (I, B, 4*M)
        xr = jnp.real(xc)
        xi = jnp.imag(xc)
        if L_pad != L:
            pad = L_pad - L
            xr = jnp.pad(xr, ((0, 0), (0, 0), (0, pad)))
            xi = jnp.pad(xi, ((0, 0), (0, 0), (0, pad)))

        # ---- Pallas kernel: complex channel mixing per mode ----
        tile_l = _choose_tile(L_pad, B, I, O, self._vmem_budget)
        out_r, out_i = spectral_channel_mix(
            xr, xi, self._wr, self._wsum, self._wdiff,
            tile_l=tile_l, vmem_limit_bytes=self._vmem_limit)          # (B, O, L_pad)

        out_c = (out_r[:, :, :L] + 1j * out_i[:, :, :L]).astype(jnp.complex64)
        out_c = out_c.reshape(B, O, 4, m1, m2, m3)

        # ---- scatter corners into full spectrum and inverse FFT (glue) ----
        out_ft = jnp.zeros((B, O, D1, D2, Dz), dtype=jnp.complex64)
        out_ft = out_ft.at[:, :, :m1, :m2, :m3].set(out_c[:, :, 0])
        out_ft = out_ft.at[:, :, D1 - m1:, :m2, :m3].set(out_c[:, :, 1])
        out_ft = out_ft.at[:, :, :m1, D2 - m2:, :m3].set(out_c[:, :, 2])
        out_ft = out_ft.at[:, :, D1 - m1:, D2 - m2:, :m3].set(out_c[:, :, 3])

        return jnp.fft.irfftn(out_ft, s=(D1, D2, D3), axes=(-3, -2, -1))

    # pure-JAX reference (no Pallas) for validation
    def reference(self, x):
        B = x.shape[0]
        m1, m2, m3 = self.modes1, self.modes2, self.modes3
        D1, D2, D3 = x.shape[-3], x.shape[-2], x.shape[-1]
        Dz = D3 // 2 + 1
        x_ft = jnp.fft.rfftn(x.astype(jnp.float32), axes=(-3, -2, -1))

        def cm(inp, w):
            wc = (w[0] + 1j * w[1]).astype(jnp.complex64)
            return jnp.einsum('bixyz,ioxyz->boxyz', inp, wc)

        w1, w2, w3, w4 = self.w_corners
        out_ft = jnp.zeros((B, self.out_channels, D1, D2, Dz), dtype=jnp.complex64)
        out_ft = out_ft.at[:, :, :m1, :m2, :m3].set(cm(x_ft[:, :, :m1, :m2, :m3], w1))
        out_ft = out_ft.at[:, :, -m1:, :m2, :m3].set(cm(x_ft[:, :, -m1:, :m2, :m3], w2))
        out_ft = out_ft.at[:, :, :m1, -m2:, :m3].set(cm(x_ft[:, :, :m1, -m2:, :m3], w3))
        out_ft = out_ft.at[:, :, -m1:, -m2:, :m3].set(cm(x_ft[:, :, -m1:, -m2:, :m3], w4))
        return jnp.fft.irfftn(out_ft, s=(D1, D2, D3), axes=(-3, -2, -1))


if __name__ == "__main__":
    key = jax.random.PRNGKey(0)
    k_w, k_x = jax.random.split(key)

    # small shapes: batch=2, in/out channels=4, spatial 16^3, 4 modes per axis
    B, Cin, Cout = 2, 4, 4
    D1 = D2 = D3 = 16
    modes = 4

    layer = SpectralConv3d(Cin, Cout, modes, modes, modes, k_w)
    x = jax.random.normal(k_x, (B, Cin, D1, D2, D3), dtype=jnp.float32)

    out = jax.block_until_ready(layer(x))
    assert out.shape == (B, Cout, D1, D2, D3), out.shape

    ref = jax.block_until_ready(layer.reference(x))
    np.testing.assert_allclose(np.asarray(out), np.asarray(ref),
                               rtol=1e-3, atol=1e-4)

    print("KERNEL_OK")
</pallas_src>

<mosaic_0001>
module attributes {stable_mosaic.version = 11 : i64} {
  func.func @_spectral_mix_kernel(%arg0: i32, %arg1: memref<4x2x256xf32, #tpu.memory_space<vmem>>, %arg2: memref<4x2x256xf32, #tpu.memory_space<vmem>>, %arg3: memref<4x4x256xf32, #tpu.memory_space<vmem>>, %arg4: memref<4x4x256xf32, #tpu.memory_space<vmem>>, %arg5: memref<4x4x256xf32, #tpu.memory_space<vmem>>, %arg6: memref<2x4x256xf32, #tpu.memory_space<vmem>>, %arg7: memref<2x4x256xf32, #tpu.memory_space<vmem>>) attributes {dimension_semantics = [#tpu.dimension_semantics<parallel>], iteration_bounds = array<i64: 1>, scalar_prefetch = 0 : i64, scratch_operands = 0 : i64, tpu.core_type = #tpu.core_type<tc>, window_params = [{transform_indices = @transform_0, window_bounds = array<i64: 4, 2, 256>}, {transform_indices = @transform_1, window_bounds = array<i64: 4, 2, 256>}, {transform_indices = @transform_2, window_bounds = array<i64: 4, 4, 256>}, {transform_indices = @transform_3, window_bounds = array<i64: 4, 4, 256>}, {transform_indices = @transform_4, window_bounds = array<i64: 4, 4, 256>}, {transform_indices = @transform_5, window_bounds = array<i64: 2, 4, 256>}, {transform_indices = @transform_6, window_bounds = array<i64: 2, 4, 256>}]} {
    %cst = arith.constant 0.000000e+00 : f32
    %0 = vector.broadcast %cst : f32 to vector<2x4x256xf32>
    %cst_0 = arith.constant 0.000000e+00 : f32
    %1 = vector.broadcast %cst_0 : f32 to vector<2x4x256xf32>
    %c0_i32 = arith.constant 0 : i32
    %2 = arith.index_cast %c0_i32 : i32 to index
    %c0 = arith.constant 0 : index
    %c0_1 = arith.constant 0 : index
    %3 = vector.load %arg1[%2, %c0, %c0_1] : memref<4x2x256xf32, #tpu.memory_space<vmem>>, vector<1x2x256xf32>
    %4 = vector.shape_cast %3 : vector<1x2x256xf32> to vector<2x256xf32>
    %5 = arith.index_cast %c0_i32 : i32 to index
    %c0_2 = arith.constant 0 : index
    %c0_3 = arith.constant 0 : index
    %6 = vector.load %arg2[%5, %c0_2, %c0_3] : memref<4x2x256xf32, #tpu.memory_space<vmem>>, vector<1x2x256xf32>
    %7 = vector.shape_cast %6 : vector<1x2x256xf32> to vector<2x256xf32>
    %8 = arith.index_cast %c0_i32 : i32 to index
    %c0_4 = arith.constant 0 : index
    %c0_5 = arith.constant 0 : index
    %9 = vector.load %arg3[%8, %c0_4, %c0_5] : memref<4x4x256xf32, #tpu.memory_space<vmem>>, vector<1x4x256xf32>
    %10 = vector.shape_cast %9 : vector<1x4x256xf32> to vector<4x256xf32>
    %11 = arith.index_cast %c0_i32 : i32 to index
    %c0_6 = arith.constant 0 : index
    %c0_7 = arith.constant 0 : index
    %12 = vector.load %arg4[%11, %c0_6, %c0_7] : memref<4x4x256xf32, #tpu.memory_space<vmem>>, vector<1x4x256xf32>
    %13 = vector.shape_cast %12 : vector<1x4x256xf32> to vector<4x256xf32>
    %14 = arith.index_cast %c0_i32 : i32 to index
    %c0_8 = arith.constant 0 : index
    %c0_9 = arith.constant 0 : index
    %15 = vector.load %arg5[%14, %c0_8, %c0_9] : memref<4x4x256xf32, #tpu.memory_space<vmem>>, vector<1x4x256xf32>
    %16 = vector.shape_cast %15 : vector<1x4x256xf32> to vector<4x256xf32>
    %17 = arith.addf %4, %7 : vector<2x256xf32>
    %18 = vector.shape_cast %17 : vector<2x256xf32> to vector<2x1x256xf32>
    %19 = vector.shape_cast %10 : vector<4x256xf32> to vector<1x4x256xf32>
    %20 = vector.broadcast %18 : vector<2x1x256xf32> to vector<2x4x256xf32>
    %21 = vector.broadcast %19 : vector<1x4x256xf32> to vector<2x4x256xf32>
    %22 = arith.mulf %20, %21 : vector<2x4x256xf32>
    %23 = vector.shape_cast %4 : vector<2x256xf32> to vector<2x1x256xf32>
    %24 = vector.shape_cast %16 : vector<4x256xf32> to vector<1x4x256xf32>
    %25 = vector.broadcast %23 : vector<2x1x256xf32> to vector<2x4x256xf32>
    %26 = vector.broadcast %24 : vector<1x4x256xf32> to vector<2x4x256xf32>
    %27 = arith.mulf %25, %26 : vector<2x4x256xf32>
    %28 = vector.shape_cast %7 : vector<2x256xf32> to vector<2x1x256xf32>
    %29 = vector.shape_cast %13 : vector<4x256xf32> to vector<1x4x256xf32>
    %30 = vector.broadcast %28 : vector<2x1x256xf32> to vector<2x4x256xf32>
    %31 = vector.broadcast %29 : vector<1x4x256xf32> to vector<2x4x256xf32>
    %32 = arith.mulf %30, %31 : vector<2x4x256xf32>
    %33 = arith.subf %22, %32 : vector<2x4x256xf32>
    %34 = arith.addf %0, %33 : vector<2x4x256xf32>
    %35 = arith.addf %22, %27 : vector<2x4x256xf32>
    %36 = arith.addf %1, %35 : vector<2x4x256xf32>
    %c1_i32 = arith.constant 1 : i32
    %37 = arith.index_cast %c1_i32 : i32 to index
    %c0_10 = arith.constant 0 : index
    %c0_11 = arith.constant 0 : index
    %38 = vector.load %arg1[%37, %c0_10, %c0_11] : memref<4x2x256xf32, #tpu.memory_space<vmem>>, vector<1x2x256xf32>
    %39 = vector.shape_cast %38 : vector<1x2x256xf32> to vector<2x256xf32>
    %40 = arith.index_cast %c1_i32 : i32 to index
    %c0_12 = arith.constant 0 : index
    %c0_13 = arith.constant 0 : index
    %41 = vector.load %arg2[%40, %c0_12, %c0_13] : memref<4x2x256xf32, #tpu.memory_space<vmem>>, vector<1x2x256xf32>
    %42 = vector.shape_cast %41 : vector<1x2x256xf32> to vector<2x256xf32>
    %43 = arith.index_cast %c1_i32 : i32 to index
    %c0_14 = arith.constant 0 : index
    %c0_15 = arith.constant 0 : index
    %44 = vector.load %arg3[%43, %c0_14, %c0_15] : memref<4x4x256xf32, #tpu.memory_space<vmem>>, vector<1x4x256xf32>
    %45 = vector.shape_cast %44 : vector<1x4x256xf32> to vector<4x256xf32>
    %46 = arith.index_cast %c1_i32 : i32 to index
    %c0_16 = arith.constant 0 : index
    %c0_17 = arith.constant 0 : index
    %47 = vector.load %arg4[%46, %c0_16, %c0_17] : memref<4x4x256xf32, #tpu.memory_space<vmem>>, vector<1x4x256xf32>
    %48 = vector.shape_cast %47 : vector<1x4x256xf32> to vector<4x256xf32>
    %49 = arith.index_cast %c1_i32 : i32 to index
    %c0_18 = arith.constant 0 : index
    %c0_19 = arith.constant 0 : index
    %50 = vector.load %arg5[%49, %c0_18, %c0_19] : memref<4x4x256xf32, #tpu.memory_space<vmem>>, vector<1x4x256xf32>
    %51 = vector.shape_cast %50 : vector<1x4x256xf32> to vector<4x256xf32>
    %52 = arith.addf %39, %42 : vector<2x256xf32>
    %53 = vector.shape_cast %52 : vector<2x256xf32> to vector<2x1x256xf32>
    %54 = vector.shape_cast %45 : vector<4x256xf32> to vector<1x4x256xf32>
    %55 = vector.broadcast %53 : vector<2x1x256xf32> to vector<2x4x256xf32>
    %56 = vector.broadcast %54 : vector<1x4x256xf32> to vector<2x4x256xf32>
    %57 = arith.mulf %55, %56 : vector<2x4x256xf32>
    %58 = vector.shape_cast %39 : vector<2x256xf32> to vector<2x1x256xf32>
    %59 = vector.shape_cast %51 : vector<4x256xf32> to vector<1x4x256xf32>
    %60 = vector.broadcast %58 : vector<2x1x256xf32> to vector<2x4x256xf32>
    %61 = vector.broadcast %59 : vector<1x4x256xf32> to vector<2x4x256xf32>
    %62 = arith.mulf %60, %61 : vector<2x4x256xf32>
    %63 = vector.shape_cast %42 : vector<2x256xf32> to vector<2x1x256xf32>
    %64 = vector.shape_cast %48 : vector<4x256xf32> to vector<1x4x256xf32>
    %65 = vector.broadcast %63 : vector<2x1x256xf32> to vector<2x4x256xf32>
    %66 = vector.broadcast %64 : vector<1x4x256xf32> to vector<2x4x256xf32>
    %67 = arith.mulf %65, %66 : vector<2x4x256xf32>
    %68 = arith.subf %57, %67 : vector<2x4x256xf32>
    %69 = arith.addf %34, %68 : vector<2x4x256xf32>
    %70 = arith.addf %57, %62 : vector<2x4x256xf32>
    %71 = arith.addf %36, %70 : vector<2x4x256xf32>
    %c2_i32 = arith.constant 2 : i32
    %72 = arith.index_cast %c2_i32 : i32 to index
    %c0_20 = arith.constant 0 : index
    %c0_21 = arith.constant 0 : index
    %73 = vector.load %arg1[%72, %c0_20, %c0_21] : memref<4x2x256xf32, #tpu.memory_space<vmem>>, vector<1x2x256xf32>
    %74 = vector.shape_cast %73 : vector<1x2x256xf32> to vector<2x256xf32>
    %75 = arith.index_cast %c2_i32 : i32 to index
    %c0_22 = arith.constant 0 : index
    %c0_23 = arith.constant 0 : index
    %76 = vector.load %arg2[%75, %c0_22, %c0_23] : memref<4x2x256xf32, #tpu.memory_space<vmem>>, vector<1x2x256xf32>
    %77 = vector.shape_cast %76 : vector<1x2x256xf32> to vector<2x256xf32>
    %78 = arith.index_cast %c2_i32 : i32 to index
    %c0_24 = arith.constant 0 : index
    %c0_25 = arith.constant 0 : index
    %79 = vector.load %arg3[%78, %c0_24, %c0_25] : memref<4x4x256xf32, #tpu.memory_space<vmem>>, vector<1x4x256xf32>
    %80 = vector.shape_cast %79 : vector<1x4x256xf32> to vector<4x256xf32>
    %81 = arith.index_cast %c2_i32 : i32 to index
    %c0_26 = arith.constant 0 : index
    %c0_27 = arith.constant 0 : index
    %82 = vector.load %arg4[%81, %c0_26, %c0_27] : memref<4x4x256xf32, #tpu.memory_space<vmem>>, vector<1x4x256xf32>
    %83 = vector.shape_cast %82 : vector<1x4x256xf32> to vector<4x256xf32>
    %84 = arith.index_cast %c2_i32 : i32 to index
    %c0_28 = arith.constant 0 : index
    %c0_29 = arith.constant 0 : index
    %85 = vector.load %arg5[%84, %c0_28, %c0_29] : memref<4x4x256xf32, #tpu.memory_space<vmem>>, vector<1x4x256xf32>
    %86 = vector.shape_cast %85 : vector<1x4x256xf32> to vector<4x256xf32>
    %87 = arith.addf %74, %77 : vector<2x256xf32>
    %88 = vector.shape_cast %87 : vector<2x256xf32> to vector<2x1x256xf32>
    %89 = vector.shape_cast %80 : vector<4x256xf32> to vector<1x4x256xf32>
    %90 = vector.broadcast %88 : vector<2x1x256xf32> to vector<2x4x256xf32>
    %91 = vector.broadcast %89 : vector<1x4x256xf32> to vector<2x4x256xf32>
    %92 = arith.mulf %90, %91 : vector<2x4x256xf32>
    %93 = vector.shape_cast %74 : vector<2x256xf32> to vector<2x1x256xf32>
    %94 = vector.shape_cast %86 : vector<4x256xf32> to vector<1x4x256xf32>
    %95 = vector.broadcast %93 : vector<2x1x256xf32> to vector<2x4x256xf32>
    %96 = vector.broadcast %94 : vector<1x4x256xf32> to vector<2x4x256xf32>
    %97 = arith.mulf %95, %96 : vector<2x4x256xf32>
    %98 = vector.shape_cast %77 : vector<2x256xf32> to vector<2x1x256xf32>
    %99 = vector.shape_cast %83 : vector<4x256xf32> to vector<1x4x256xf32>
    %100 = vector.broadcast %98 : vector<2x1x256xf32> to vector<2x4x256xf32>
    %101 = vector.broadcast %99 : vector<1x4x256xf32> to vector<2x4x256xf32>
    %102 = arith.mulf %100, %101 : vector<2x4x256xf32>
    %103 = arith.subf %92, %102 : vector<2x4x256xf32>
    %104 = arith.addf %69, %103 : vector<2x4x256xf32>
    %105 = arith.addf %92, %97 : vector<2x4x256xf32>
    %106 = arith.addf %71, %105 : vector<2x4x256xf32>
    %c3_i32 = arith.constant 3 : i32
    %107 = arith.index_cast %c3_i32 : i32 to index
    %c0_30 = arith.constant 0 : index
    %c0_31 = arith.constant 0 : index
    %108 = vector.load %arg1[%107, %c0_30, %c0_31] : memref<4x2x256xf32, #tpu.memory_space<vmem>>, vector<1x2x256xf32>
    %109 = vector.shape_cast %108 : vector<1x2x256xf32> to vector<2x256xf32>
    %110 = arith.index_cast %c3_i32 : i32 to index
    %c0_32 = arith.constant 0 : index
    %c0_33 = arith.constant 0 : index
    %111 = vector.load %arg2[%110, %c0_32, %c0_33] : memref<4x2x256xf32, #tpu.memory_space<vmem>>, vector<1x2x256xf32>
    %112 = vector.shape_cast %111 : vector<1x2x256xf32> to vector<2x256xf32>
    %113 = arith.index_cast %c3_i32 : i32 to index
    %c0_34 = arith.constant 0 : index
    %c0_35 = arith.constant 0 : index
    %114 = vector.load %arg3[%113, %c0_34, %c0_35] : memref<4x4x256xf32, #tpu.memory_space<vmem>>, vector<1x4x256xf32>
    %115 = vector.shape_cast %114 : vector<1x4x256xf32> to vector<4x256xf32>
    %116 = arith.index_cast %c3_i32 : i32 to index
    %c0_36 = arith.constant 0 : index
    %c0_37 = arith.constant 0 : index
    %117 = vector.load %arg4[%116, %c0_36, %c0_37] : memref<4x4x256xf32, #tpu.memory_space<vmem>>, vector<1x4x256xf32>
    %118 = vector.shape_cast %117 : vector<1x4x256xf32> to vector<4x256xf32>
    %119 = arith.index_cast %c3_i32 : i32 to index
    %c0_38 = arith.constant 0 : index
    %c0_39 = arith.constant 0 : index
    %120 = vector.load %arg5[%119, %c0_38, %c0_39] : memref<4x4x256xf32, #tpu.memory_space<vmem>>, vector<1x4x256xf32>
    %121 = vector.shape_cast %120 : vector<1x4x256xf32> to vector<4x256xf32>
    %122 = arith.addf %109, %112 : vector<2x256xf32>
    %123 = vector.shape_cast %122 : vector<2x256xf32> to vector<2x1x256xf32>
    %124 = vector.shape_cast %115 : vector<4x256xf32> to vector<1x4x256xf32>
    %125 = vector.broadcast %123 : vector<2x1x256xf32> to vector<2x4x256xf32>
    %126 = vector.broadcast %124 : vector<1x4x256xf32> to vector<2x4x256xf32>
    %127 = arith.mulf %125, %126 : vector<2x4x256xf32>
    %128 = vector.shape_cast %109 : vector<2x256xf32> to vector<2x1x256xf32>
    %129 = vector.shape_cast %121 : vector<4x256xf32> to vector<1x4x256xf32>
    %130 = vector.broadcast %128 : vector<2x1x256xf32> to vector<2x4x256xf32>
    %131 = vector.broadcast %129 : vector<1x4x256xf32> to vector<2x4x256xf32>
    %132 = arith.mulf %130, %131 : vector<2x4x256xf32>
    %133 = vector.shape_cast %112 : vector<2x256xf32> to vector<2x1x256xf32>
    %134 = vector.shape_cast %118 : vector<4x256xf32> to vector<1x4x256xf32>
    %135 = vector.broadcast %133 : vector<2x1x256xf32> to vector<2x4x256xf32>
    %136 = vector.broadcast %134 : vector<1x4x256xf32> to vector<2x4x256xf32>
    %137 = arith.mulf %135, %136 : vector<2x4x256xf32>
    %138 = arith.subf %127, %137 : vector<2x4x256xf32>
    %139 = arith.addf %104, %138 : vector<2x4x256xf32>
    %140 = arith.addf %127, %132 : vector<2x4x256xf32>
    %141 = arith.addf %106, %140 : vector<2x4x256xf32>
    %c4_i32 = arith.constant 4 : i32
    %c0_40 = arith.constant 0 : index
    %c0_41 = arith.constant 0 : index
    %c0_42 = arith.constant 0 : index
    %142 = vector.load %arg6[%c0_40, %c0_41, %c0_42] : memref<2x4x256xf32, #tpu.memory_space<vmem>>, vector<2x4x256xf32>
    tpu.vector_store %arg6[%c0_40, %c0_41, %c0_42], %139 {strides = array<i32>} : memref<2x4x256xf32, #tpu.memory_space<vmem>>, vector<2x4x256xf32>,
    %c0_43 = arith.constant 0 : index
    %c0_44 = arith.constant 0 : index
    %c0_45 = arith.constant 0 : index
    %143 = vector.load %arg7[%c0_43, %c0_44, %c0_45] : memref<2x4x256xf32, #tpu.memory_space<vmem>>, vector<2x4x256xf32>
    tpu.vector_store %arg7[%c0_43, %c0_44, %c0_45], %141 {strides = array<i32>} : memref<2x4x256xf32, #tpu.memory_space<vmem>>, vector<2x4x256xf32>,
    return
  }
  func.func @transform_0(%arg0: i32) -> (i32, i32, i32) {
    %c0_i32 = arith.constant 0 : i32
    %c0_i32_0 = arith.constant 0 : i32
    %c0_i32_1 = arith.constant 0 : i32
    return %c0_i32, %c0_i32_0, %arg0 : i32, i32, i32
  }
  func.func @transform_1(%arg0: i32) -> (i32, i32, i32) {
    %c0_i32 = arith.constant 0 : i32
    %c0_i32_0 = arith.constant 0 : i32
    %c0_i32_1 = arith.constant 0 : i32
    return %c0_i32, %c0_i32_0, %arg0 : i32, i32, i32
  }
  func.func @transform_2(%arg0: i32) -> (i32, i32, i32) {
    %c0_i32 = arith.constant 0 : i32
    %c0_i32_0 = arith.constant 0 : i32
    %c0_i32_1 = arith.constant 0 : i32
    return %c0_i32, %c0_i32_0, %arg0 : i32, i32, i32
  }
  func.func @transform_3(%arg0: i32) -> (i32, i32, i32) {
    %c0_i32 = arith.constant 0 : i32
    %c0_i32_0 = arith.constant 0 : i32
    %c0_i32_1 = arith.constant 0 : i32
    return %c0_i32, %c0_i32_0, %arg0 : i32, i32, i32
  }
  func.func @transform_4(%arg0: i32) -> (i32, i32, i32) {
    %c0_i32 = arith.constant 0 : i32
    %c0_i32_0 = arith.constant 0 : i32
    %c0_i32_1 = arith.constant 0 : i32
    return %c0_i32, %c0_i32_0, %arg0 : i32, i32, i32
  }
  func.func @transform_5(%arg0: i32) -> (i32, i32, i32) {
    %c0_i32 = arith.constant 0 : i32
    %c0_i32_0 = arith.constant 0 : i32
    %c0_i32_1 = arith.constant 0 : i32
    return %c0_i32, %c0_i32_0, %arg0 : i32, i32, i32
  }
  func.func @transform_6(%arg0: i32) -> (i32, i32, i32) {
    %c0_i32 = arith.constant 0 : i32
    %c0_i32_0 = arith.constant 0 : i32
    %c0_i32_1 = arith.constant 0 : i32
    return %c0_i32, %c0_i32_0, %arg0 : i32, i32, i32
  }
}

</mosaic_0001>

<llo_original>
// kernel: tpu_custom_call.1
$region0: #{tpu_custom_call.1}
  #allocation0 [shape = 'u32[]', space=smem, size = 0x4, offset = 0x4, fixed_abs, tag = 'smem constant byte address 0x4 - core index']
  #allocation1 [shape = 'u32[144,128]{1,0:T(1,128)}', space=vmem, size = 0x12000, scoped, tag = 'internal scratch']
  %s0 = inlined_call_operand.hbm [shape: f32[4,2,256], index: 0, kind: input, shape index: {}]
  %s1 = inlined_call_operand.hbm [shape: f32[4,2,256], index: 1, kind: input, shape index: {}]
  %s2 = inlined_call_operand.hbm [shape: f32[4,4,256], index: 2, kind: input, shape index: {}]
  %s3 = inlined_call_operand.hbm [shape: f32[4,4,256], index: 3, kind: input, shape index: {}]
  %s4 = inlined_call_operand.hbm [shape: f32[4,4,256], index: 4, kind: input, shape index: {}]
  %s5 = inlined_call_operand.hbm [shape: f32[2,4,256], index: 5, kind: output, shape index: {0}]
  %s6 = inlined_call_operand.hbm [shape: f32[2,4,256], index: 6, kind: output, shape index: {1}]
  %7 = xla_tuple %s5, %s6
  %s8 = sld [smem:[#allocation0]]
  $region58: #{tpu_custom_call.1} parent=0
    _
  %s10 = ssub.s32 1, %s8
  %s11 = scalar_select 0, %s10, %s8
  $region1: #{tpu_custom_call.1} parent=0
    #allocation2 [shape = 'u8[8192]{0}', space=vmem, size = 0x2000, scoped, tag = 'input window, operand 0, single buffered']
    #allocation3 [shape = 's32[1]{0}', space=sflag, size = 0x4, scoped, tag = 'scoped memory for tpu_custom_call.1']
    #allocation4 [shape = 's32[1]{0}', space=sflag, size = 0x4, scoped, tag = 'scoped memory for tpu_custom_call.1']
    #allocation5 [shape = 'u8[8192]{0}', space=vmem, size = 0x2000, scoped, tag = 'input window, operand 1, single buffered']
    #allocation6 [shape = 's32[1]{0}', space=sflag, size = 0x4, scoped, tag = 'scoped memory for tpu_custom_call.1']
    #allocation7 [shape = 'u8[16384]{0}', space=vmem, size = 0x4000, scoped, tag = 'input window, operand 2, single buffered']
    #allocation8 [shape = 'u8[16384]{0}', space=vmem, size = 0x4000, scoped, tag = 'input window, operand 3, single buffered']
    #allocation9 [shape = 's32[1]{0}', space=sflag, size = 0x4, scoped, tag = 'scoped memory for tpu_custom_call.1']
    #allocation10 [shape = 'u8[16384]{0}', space=vmem, size = 0x4000, scoped, tag = 'input window, operand 4, single buffered']
    #allocation11 [shape = 'u8[8192]{0}', space=vmem, size = 0x2000, scoped, tag = 'output window, operand 0, single buffered']
    #allocation12 [shape = 'u8[8192]{0}', space=vmem, size = 0x2000, scoped, tag = 'output window, operand 1, single buffered']
    #allocation13 [shape = 's32[1]{0}', space=sflag, size = 0x4, scoped, tag = 'scoped memory for tpu_custom_call.1']
    %12 = vsyncpa [#allocation3], 0
    %13 = vsyncpa [#allocation6], 0
    %14 = vsyncpa [#allocation9], 0
    %15 = vsyncpa [#allocation4], 0
    %16 = vsyncpa [#allocation13], 0
    // Predicated region
    $region2: #{tpu_custom_call.1} parent=1 // pred_check
      _
    $region3: #{tpu_custom_call.1} parent=1 // pred_check_branch
      %18 = sbr.rel (0) target = $region5
    $region4: #{tpu_custom_call.1} parent=1 // pred_region
      %s20 = ssub.s32 256, 256
      %21 = vsyncadd [#allocation3], %s20
      %s22 = sshll.u32 [#allocation2], 4
      %s23 = int_to_ptr.vmem [resolvable:$true] %s22
      %28 = dma.hbm_to_vmem [thread:$0]  %s0, 256, %s23, [#allocation3], 64, 64, 4
    $region5: #{tpu_custom_call.1} parent=1 // pred_fallthru
      _
    // Predicated region
    $region6: #{tpu_custom_call.1} parent=1 // pred_check
      _
    $region7: #{tpu_custom_call.1} parent=1 // pred_check_branch
      %30 = sbr.rel (0) target = $region9
    $region8: #{tpu_custom_call.1} parent=1 // pred_region
      %s32 = ssub.s32 256, 256
      %33 = vsyncadd [#allocation6], %s32
      %s34 = sshll.u32 [#allocation5], 4
      %s35 = int_to_ptr.vmem [resolvable:$true] %s34
      %40 = dma.hbm_to_vmem [thread:$0]  %s1, 256, %s35, [#allocation6], 64, 64, 4
    $region9: #{tpu_custom_call.1} parent=1 // pred_fallthru
      _
    // Predicated region
    $region10: #{tpu_custom_call.1} parent=1 // pred_check
      _
    $region11: #{tpu_custom_call.1} parent=1 // pred_check_branch
      %42 = sbr.rel (0) target = $region13
    $region12: #{tpu_custom_call.1} parent=1 // pred_region
      %s44 = ssub.s32 512, 512
      %45 = vsyncadd [#allocation6], %s44
      %s46 = sshll.u32 [#allocation7], 4
      %s47 = int_to_ptr.vmem [resolvable:$true] %s46
      %52 = dma.hbm_to_vmem [thread:$0]  %s2, 512, %s47, [#allocation6], 128, 128, 8
    $region13: #{tpu_custom_call.1} parent=1 // pred_fallthru
      _
    // Predicated region
    $region14: #{tpu_custom_call.1} parent=1 // pred_check
      _
    $region15: #{tpu_custom_call.1} parent=1 // pred_check_branch
      %54 = sbr.rel (0) target = $region17
    $region16: #{tpu_custom_call.1} parent=1 // pred_region
      %s56 = ssub.s32 512, 512
      %57 = vsyncadd [#allocation9], %s56
      %s58 = sshll.u32 [#allocation8], 4
      %s59 = int_to_ptr.vmem [resolvable:$true] %s58
      %64 = dma.hbm_to_vmem [thread:$0]  %s3, 512, %s59, [#allocation9], 128, 128, 8
    $region17: #{tpu_custom_call.1} parent=1 // pred_fallthru
      _
    // Predicated region
    $region18: #{tpu_custom_call.1} parent=1 // pred_check
      _
    $region19: #{tpu_custom_call.1} parent=1 // pred_check_branch
      %66 = sbr.rel (0) target = $region21
    $region20: #{tpu_custom_call.1} parent=1 // pred_region
      %s68 = ssub.s32 512, 512
      %69 = vsyncadd [#allocation9], %s68
      %s70 = sshll.u32 [#allocation10], 4
      %s71 = int_to_ptr.vmem [resolvable:$true] %s70
      %76 = dma.hbm_to_vmem [thread:$0]  %s4, 512, %s71, [#allocation9], 128, 128, 8
    $region21: #{tpu_custom_call.1} parent=1 // pred_fallthru
      _
    // Predicated region
    $region22: #{tpu_custom_call.1} parent=1 // pred_check
      _
    $region23: #{tpu_custom_call.1} parent=1 // pred_check_branch
      %78 = sbr.rel (0) target = $region25
    $region24: #{tpu_custom_call.1} parent=1 // pred_region
      %79 = dma.done [#allocation3], 256
    $region25: #{tpu_custom_call.1} parent=1 // pred_fallthru
      _
    // Predicated region
    $region26: #{tpu_custom_call.1} parent=1 // pred_check
      _
    $region27: #{tpu_custom_call.1} parent=1 // pred_check_branch
      %81 = sbr.rel (0) target = $region29
    $region28: #{tpu_custom_call.1} parent=1 // pred_region
      %82 = dma.done [#allocation6], 256
    $region29: #{tpu_custom_call.1} parent=1 // pred_fallthru
      _
    // Predicated region
    $region30: #{tpu_custom_call.1} parent=1 // pred_check
      _
    $region31: #{tpu_custom_call.1} parent=1 // pred_check_branch
      %84 = sbr.rel (0) target = $region33
    $region32: #{tpu_custom_call.1} parent=1 // pred_region
      %85 = dma.done [#allocation6], 512
    $region33: #{tpu_custom_call.1} parent=1 // pred_fallthru
      _
    // Predicated region
    $region34: #{tpu_custom_call.1} parent=1 // pred_check
      _
    $region35: #{tpu_custom_call.1} parent=1 // pred_check_branch
      %87 = sbr.rel (0) target = $region37
    $region36: #{tpu_custom_call.1} parent=1 // pred_region
      %88 = dma.done [#allocation9], 512
    $region37: #{tpu_custom_call.1} parent=1 // pred_fallthru
      _
    // Predicated region
    $region38: #{tpu_custom_call.1} parent=1 // pred_check
      _
    $region39: #{tpu_custom_call.1} parent=1 // pred_check_branch
      %90 = sbr.rel (0) target = $region41
    $region40: #{tpu_custom_call.1} parent=1 // pred_region
      %91 = dma.done [#allocation9], 512
    $region41: #{tpu_custom_call.1} parent=1 // pred_fallthru
      _
    %v92 = vld [vmem:[#allocation2] sm:$0xf]
    %v93 = vld [vmem:[#allocation5] sm:$0xf]
    %v94 = vld [vmem:[#allocation7] sm:$0xff]
    %v95 = vld [vmem:[#allocation8] sm:$0xff]
    %v96 = vld [vmem:[#allocation10] sm:$0xff]
    %v97 = vadd.f32 %v92, %v93
    %v100 = vunpack.c.l.s4 1966171168
    %v101 = vunpack.c.0.s8 %v100
    %v102 = vlaneseq
    %v103 = vshrl.u32 %v102, 7
    %v104 = vsub.s32 %v101, %v103
    %v105 = vrot.slane %v97, %v104
    %v106 = vcombine.high %v105, %v105
    %v107 = vlaneseq
    %v108 = vshrl.u32 %v107, 7
    %v109 = vsub.s32 0, %v108
    %v110 = vrot.slane %v105, %v109
    %v111 = vlaneseq
    %v112 = vshrl.u32 %v111, 7
    %v113 = vsub.s32 1, %v112
    %v114 = vrot.slane %v105, %v113
    %v115 = vlaneseq
    %v116 = vshrl.u32 %v115, 7
    %v117 = vsub.s32 0, %v116
    %v118 = vrot.slane %v106, %v117
    %v119 = vlaneseq
    %v120 = vshrl.u32 %v119, 7
    %v121 = vsub.s32 1, %v120
    %v122 = vrot.slane %v106, %v121
    %v128 = vcombine.high %v94, %v94
    %v130 = vmul.f32 %v110, %v94
    %v131 = vmul.f32 %v114, %v128
    %v132 = vmul.f32 %v118, %v94
    %v133 = vmul.f32 %v122, %v128
    %v136 = vunpack.c.l.s4 1966171168
    %v137 = vunpack.c.0.s8 %v136
    %v138 = vlaneseq
    %v139 = vshrl.u32 %v138, 7
    %v140 = vsub.s32 %v137, %v139
    %v141 = vrot.slane %v92, %v140
    %v142 = vcombine.high %v141, %v141
    %v143 = vlaneseq
    %v144 = vshrl.u32 %v143, 7
    %v145 = vsub.s32 0, %v144
    %v146 = vrot.slane %v141, %v145
    %v147 = vlaneseq
    %v148 = vshrl.u32 %v147, 7
    %v149 = vsub.s32 1, %v148
    %v150 = vrot.slane %v141, %v149
    %v151 = vlaneseq
    %v152 = vshrl.u32 %v151, 7
    %v153 = vsub.s32 0, %v152
    %v154 = vrot.slane %v142, %v153
    %v155 = vlaneseq
    %v156 = vshrl.u32 %v155, 7
    %v157 = vsub.s32 1, %v156
    %v158 = vrot.slane %v142, %v157
    %v164 = vcombine.high %v96, %v96
    %v166 = vmul.f32 %v146, %v96
    %v167 = vmul.f32 %v150, %v164
    %v168 = vmul.f32 %v154, %v96
    %v169 = vmul.f32 %v158, %v164
    %v172 = vunpack.c.l.s4 1966171168
    %v173 = vunpack.c.0.s8 %v172
    %v174 = vlaneseq
    %v175 = vshrl.u32 %v174, 7
    %v176 = vsub.s32 %v173, %v175
    %v177 = vrot.slane %v93, %v176
    %v178 = vcombine.high %v177, %v177
    %v179 = vlaneseq
    %v180 = vshrl.u32 %v179, 7
    %v181 = vsub.s32 0, %v180
    %v182 = vrot.slane %v177, %v181
    %v183 = vlaneseq
    %v184 = vshrl.u32 %v183, 7
    %v185 = vsub.s32 1, %v184
    %v186 = vrot.slane %v177, %v185
    %v187 = vlaneseq
    %v188 = vshrl.u32 %v187, 7
    %v189 = vsub.s32 0, %v188
    %v190 = vrot.slane %v178, %v189
    %v191 = vlaneseq
    %v192 = vshrl.u32 %v191, 7
    %v193 = vsub.s32 1, %v192
    %v194 = vrot.slane %v178, %v193
    %v200 = vcombine.high %v95, %v95
    %v202 = vmul.f32 %v182, %v95
    %v203 = vmul.f32 %v186, %v200
    %v204 = vmul.f32 %v190, %v95
    %v205 = vmul.f32 %v194, %v200
    %v206 = vsub.f32 %v130, %v202
    %v207 = vsub.f32 %v131, %v203
    %v208 = vsub.f32 %v132, %v204
    %v209 = vsub.f32 %v133, %v205
    %v210 = vadd.f32 %v206, 0.0
    %v211 = vadd.f32 %v207, 0.0
    %v212 = vadd.f32 %v208, 0.0
    %v213 = vadd.f32 %v209, 0.0
    %v214 = vadd.f32 %v130, %v166
    %v215 = vadd.f32 %v131, %v167
    %v216 = vadd.f32 %v132, %v168
    %v217 = vadd.f32 %v133, %v169
    %v218 = vadd.f32 %v214, 0.0
    %v219 = vadd.f32 %v215, 0.0
    %v220 = vadd.f32 %v216, 0.0
    %v221 = vadd.f32 %v217, 0.0
    %s222 = scalar_lea.vmem [#allocation2], 4
    %v223 = vld [vmem:[%s222] sm:$0xf]
    %s224 = scalar_lea.vmem [#allocation5], 4
    %v225 = vld [vmem:[%s224] sm:$0xf]
    %s226 = scalar_lea.vmem [#allocation7], 8
    %v227 = vld [vmem:[%s226] sm:$0xff]
    %s228 = scalar_lea.vmem [#allocation8], 8
    %v229 = vld [vmem:[%s228] sm:$0xff]
    %s230 = scalar_lea.vmem [#allocation10], 8
    %v231 = vld [vmem:[%s230] sm:$0xff]
    %v232 = vadd.f32 %v223, %v225
    %v235 = vunpack.c.l.s4 1966171168
    %v236 = vunpack.c.0.s8 %v235
    %v237 = vlaneseq
    %v238 = vshrl.u32 %v237, 7
    %v239 = vsub.s32 %v236, %v238
    %v240 = vrot.slane %v232, %v239
    %v241 = vcombine.high %v240, %v240
    %v242 = vlaneseq
    %v243 = vshrl.u32 %v242, 7
    %v244 = vsub.s32 0, %v243
    %v245 = vrot.slane %v240, %v244
    %v246 = vlaneseq
    %v247 = vshrl.u32 %v246, 7
    %v248 = vsub.s32 1, %v247
    %v249 = vrot.slane %v240, %v248
    %v250 = vlaneseq
    %v251 = vshrl.u32 %v250, 7
    %v252 = vsub.s32 0, %v251
    %v253 = vrot.slane %v241, %v252
    %v254 = vlaneseq
    %v255 = vshrl.u32 %v254, 7
    %v256 = vsub.s32 1, %v255
    %v257 = vrot.slane %v241, %v256
    %v263 = vcombine.high %v227, %v227
    %v265 = vmul.f32 %v245, %v227
    %v266 = vmul.f32 %v249, %v263
    %v267 = vmul.f32 %v253, %v227
    %v268 = vmul.f32 %v257, %v263
    %v271 = vunpack.c.l.s4 1966171168
    %v272 = vunpack.c.0.s8 %v271
    %v273 = vlaneseq
    %v274 = vshrl.u32 %v273, 7
    %v275 = vsub.s32 %v272, %v274
    %v276 = vrot.slane %v223, %v275
    %v277 = vcombine.high %v276, %v276
    %v278 = vlaneseq
    %v279 = vshrl.u32 %v278, 7
    %v280 = vsub.s32 0, %v279
    %v281 = vrot.slane %v276, %v280
    %v282 = vlaneseq
    %v283 = vshrl.u32 %v282, 7
    %v284 = vsub.s32 1, %v283
    %v285 = vrot.slane %v276, %v284
    %v286 = vlaneseq
    %v287 = vshrl.u32 %v286, 7
    %v288 = vsub.s32 0, %v287
    %v289 = vrot.slane %v277, %v288
    %v290 = vlaneseq
    %v291 = vshrl.u32 %v290, 7
    %v292 = vsub.s32 1, %v291
    %v293 = vrot.slane %v277, %v292
    %v299 = vcombine.high %v231, %v231
    %v301 = vmul.f32 %v281, %v231
    %v302 = vmul.f32 %v285, %v299
    %v303 = vmul.f32 %v289, %v231
    %v304 = vmul.f32 %v293, %v299
    %v307 = vunpack.c.l.s4 1966171168
    %v308 = vunpack.c.0.s8 %v307
    %v309 = vlaneseq
    %v310 = vshrl.u32 %v309, 7
    %v311 = vsub.s32 %v308, %v310
    %v312 = vrot.slane %v225, %v311
    %v313 = vcombine.high %v312, %v312
    %v314 = vlaneseq
    %v315 = vshrl.u32 %v314, 7
    %v316 = vsub.s32 0, %v315
    %v317 = vrot.slane %v312, %v316
    %v318 = vlaneseq
    %v319 = vshrl.u32 %v318, 7
    %v320 = vsub.s32 1, %v319
    %v321 = vrot.slane %v312, %v320
    %v322 = vlaneseq
    %v323 = vshrl.u32 %v322, 7
    %v324 = vsub.s32 0, %v323
    %v325 = vrot.slane %v313, %v324
    %v326 = vlaneseq
    %v327 = vshrl.u32 %v326, 7
    %v328 = vsub.s32 1, %v327
    %v329 = vrot.slane %v313, %v328
    %v335 = vcombine.high %v229, %v229
    %v337 = vmul.f32 %v317, %v229
    %v338 = vmul.f32 %v321, %v335
    %v339 = vmul.f32 %v325, %v229
    %v340 = vmul.f32 %v329, %v335
    %v341 = vsub.f32 %v265, %v337
    %v342 = vsub.f32 %v266, %v338
    %v343 = vsub.f32 %v267, %v339
    %v344 = vsub.f32 %v268, %v340
    %v345 = vadd.f32 %v210, %v341
    %v346 = vadd.f32 %v211, %v342
    %v347 = vadd.f32 %v212, %v343
    %v348 = vadd.f32 %v213, %v344
    %v349 = vadd.f32 %v265, %v301
    %v350 = vadd.f32 %v266, %v302
    %v351 = vadd.f32 %v267, %v303
    %v352 = vadd.f32 %v268, %v304
    %v353 = vadd.f32 %v218, %v349
    %v354 = vadd.f32 %v219, %v350
    %v355 = vadd.f32 %v220, %v351
    %v356 = vadd.f32 %v221, %v352
    %s357 = scalar_lea.vmem [#allocation2], 8
    %v358 = vld [vmem:[%s357] sm:$0xf]
    %s359 = scalar_lea.vmem [#allocation5], 8
    %v360 = vld [vmem:[%s359] sm:$0xf]
    %s361 = scalar_lea.vmem [#allocation7], 16
    %v362 = vld [vmem:[%s361] sm:$0xff]
    %s363 = scalar_lea.vmem [#allocation8], 16
    %v364 = vld [vmem:[%s363] sm:$0xff]
    %s365 = scalar_lea.vmem [#allocation10], 16
    %v366 = vld [vmem:[%s365] sm:$0xff]
    %v367 = vadd.f32 %v358, %v360
    %v370 = vunpack.c.l.s4 1966171168
    %v371 = vunpack.c.0.s8 %v370
    %v372 = vlaneseq
    %v373 = vshrl.u32 %v372, 7
    %v374 = vsub.s32 %v371, %v373
    %v375 = vrot.slane %v367, %v374
    %v376 = vcombine.high %v375, %v375
    %v377 = vlaneseq
    %v378 = vshrl.u32 %v377, 7
    %v379 = vsub.s32 0, %v378
    %v380 = vrot.slane %v375, %v379
    %v381 = vlaneseq
    %v382 = vshrl.u32 %v381, 7
    %v383 = vsub.s32 1, %v382
    %v384 = vrot.slane %v375, %v383
    %v385 = vlaneseq
    %v386 = vshrl.u32 %v385, 7
    %v387 = vsub.s32 0, %v386
    %v388 = vrot.slane %v376, %v387
    %v389 = vlaneseq
    %v390 = vshrl.u32 %v389, 7
    %v391 = vsub.s32 1, %v390
    %v392 = vrot.slane %v376, %v391
    %v398 = vcombine.high %v362, %v362
    %v400 = vmul.f32 %v380, %v362
    %v401 = vmul.f32 %v384, %v398
    %v402 = vmul.f32 %v388, %v362
    %v403 = vmul.f32 %v392, %v398
    %v406 = vunpack.c.l.s4 1966171168
    %v407 = vunpack.c.0.s8 %v406
    %v408 = vlaneseq
    %v409 = vshrl.u32 %v408, 7
    %v410 = vsub.s32 %v407, %v409
    %v411 = vrot.slane %v358, %v410
    %v412 = vcombine.high %v411, %v411
    %v413 = vlaneseq
    %v414 = vshrl.u32 %v413, 7
    %v415 = vsub.s32 0, %v414
    %v416 = vrot.slane %v411, %v415
    %v417 = vlaneseq
    %v418 = vshrl.u32 %v417, 7
    %v419 = vsub.s32 1, %v418
    %v420 = vrot.slane %v411, %v419
    %v421 = vlaneseq
    %v422 = vshrl.u32 %v421, 7
    %v423 = vsub.s32 0, %v422
    %v424 = vrot.slane %v412, %v423
    %v425 = vlaneseq
    %v426 = vshrl.u32 %v425, 7
    %v427 = vsub.s32 1, %v426
    %v428 = vrot.slane %v412, %v427
    %v434 = vcombine.high %v366, %v366
    %v436 = vmul.f32 %v416, %v366
    %v437 = vmul.f32 %v420, %v434
    %v438 = vmul.f32 %v424, %v366
    %v439 = vmul.f32 %v428, %v434
    %v442 = vunpack.c.l.s4 1966171168
    %v443 = vunpack.c.0.s8 %v442
    %v444 = vlaneseq
    %v445 = vshrl.u32 %v444, 7
    %v446 = vsub.s32 %v443, %v445
    %v447 = vrot.slane %v360, %v446
    %v448 = vcombine.high %v447, %v447
    %v449 = vlaneseq
    %v450 = vshrl.u32 %v449, 7
    %v451 = vsub.s32 0, %v450
    %v452 = vrot.slane %v447, %v451
    %v453 = vlaneseq
    %v454 = vshrl.u32 %v453, 7
    %v455 = vsub.s32 1, %v454
    %v456 = vrot.slane %v447, %v455
    %v457 = vlaneseq
    %v458 = vshrl.u32 %v457, 7
    %v459 = vsub.s32 0, %v458
    %v460 = vrot.slane %v448, %v459
    %v461 = vlaneseq
    %v462 = vshrl.u32 %v461, 7
    %v463 = vsub.s32 1, %v462
    %v464 = vrot.slane %v448, %v463
    %v470 = vcombine.high %v364, %v364
    %v472 = vmul.f32 %v452, %v364
    %v473 = vmul.f32 %v456, %v470
    %v474 = vmul.f32 %v460, %v364
    %v475 = vmul.f32 %v464, %v470
    %v476 = vsub.f32 %v400, %v472
    %v477 = vsub.f32 %v401, %v473
    %v478 = vsub.f32 %v402, %v474
    %v479 = vsub.f32 %v403, %v475
    %v480 = vadd.f32 %v345, %v476
    %v481 = vadd.f32 %v346, %v477
    %v482 = vadd.f32 %v347, %v478
    %v483 = vadd.f32 %v348, %v479
    %v484 = vadd.f32 %v400, %v436
    %v485 = vadd.f32 %v401, %v437
    %v486 = vadd.f32 %v402, %v438
    %v487 = vadd.f32 %v403, %v439
    %v488 = vadd.f32 %v353, %v484
    %v489 = vadd.f32 %v354, %v485
    %v490 = vadd.f32 %v355, %v486
    %v491 = vadd.f32 %v356, %v487
    %s492 = scalar_lea.vmem [#allocation2], 12
    %v493 = vld [vmem:[%s492] sm:$0xf]
    %s494 = scalar_lea.vmem [#allocation5], 12
    %v495 = vld [vmem:[%s494] sm:$0xf]
    %s496 = scalar_lea.vmem [#allocation7], 24
    %v497 = vld [vmem:[%s496] sm:$0xff]
    %s498 = scalar_lea.vmem [#allocation8], 24
    %v499 = vld [vmem:[%s498] sm:$0xff]
    %s500 = scalar_lea.vmem [#allocation10], 24
    %v501 = vld [vmem:[%s500] sm:$0xff]
    %v502 = vadd.f32 %v493, %v495
    %v505 = vunpack.c.l.s4 1966171168
    %v506 = vunpack.c.0.s8 %v505
    %v507 = vlaneseq
    %v508 = vshrl.u32 %v507, 7
    %v509 = vsub.s32 %v506, %v508
    %v510 = vrot.slane %v502, %v509
    %v511 = vcombine.high %v510, %v510
    %v512 = vlaneseq
    %v513 = vshrl.u32 %v512, 7
    %v514 = vsub.s32 0, %v513
    %v515 = vrot.slane %v510, %v514
    %v516 = vlaneseq
    %v517 = vshrl.u32 %v516, 7
    %v518 = vsub.s32 1, %v517
    %v519 = vrot.slane %v510, %v518
    %v520 = vlaneseq
    %v521 = vshrl.u32 %v520, 7
    %v522 = vsub.s32 0, %v521
    %v523 = vrot.slane %v511, %v522
    %v524 = vlaneseq
    %v525 = vshrl.u32 %v524, 7
    %v526 = vsub.s32 1, %v525
    %v527 = vrot.slane %v511, %v526
    %v533 = vcombine.high %v497, %v497
    %v535 = vmul.f32 %v515, %v497
    %v536 = vmul.f32 %v519, %v533
    %v537 = vmul.f32 %v523, %v497
    %v538 = vmul.f32 %v527, %v533
    %v541 = vunpack.c.l.s4 1966171168
    %v542 = vunpack.c.0.s8 %v541
    %v543 = vlaneseq
    %v544 = vshrl.u32 %v543, 7
    %v545 = vsub.s32 %v542, %v544
    %v546 = vrot.slane %v493, %v545
    %v547 = vcombine.high %v546, %v546
    %v548 = vlaneseq
    %v549 = vshrl.u32 %v548, 7
    %v550 = vsub.s32 0, %v549
    %v551 = vrot.slane %v546, %v550
    %v552 = vlaneseq
    %v553 = vshrl.u32 %v552, 7
    %v554 = vsub.s32 1, %v553
    %v555 = vrot.slane %v546, %v554
    %v556 = vlaneseq
    %v557 = vshrl.u32 %v556, 7
    %v558 = vsub.s32 0, %v557
    %v559 = vrot.slane %v547, %v558
    %v560 = vlaneseq
    %v561 = vshrl.u32 %v560, 7
    %v562 = vsub.s32 1, %v561
    %v563 = vrot.slane %v547, %v562
    %v569 = vcombine.high %v501, %v501
    %v571 = vmul.f32 %v551, %v501
    %v572 = vmul.f32 %v555, %v569
    %v573 = vmul.f32 %v559, %v501
    %v574 = vmul.f32 %v563, %v569
    %v577 = vunpack.c.l.s4 1966171168
    %v578 = vunpack.c.0.s8 %v577
    %v579 = vlaneseq
    %v580 = vshrl.u32 %v579, 7
    %v581 = vsub.s32 %v578, %v580
    %v582 = vrot.slane %v495, %v581
    %v583 = vcombine.high %v582, %v582
    %v584 = vlaneseq
    %v585 = vshrl.u32 %v584, 7
    %v586 = vsub.s32 0, %v585
    %v587 = vrot.slane %v582, %v586
    %v588 = vlaneseq
    %v589 = vshrl.u32 %v588, 7
    %v590 = vsub.s32 1, %v589
    %v591 = vrot.slane %v582, %v590
    %v592 = vlaneseq
    %v593 = vshrl.u32 %v592, 7
    %v594 = vsub.s32 0, %v593
    %v595 = vrot.slane %v583, %v594
    %v596 = vlaneseq
    %v597 = vshrl.u32 %v596, 7
    %v598 = vsub.s32 1, %v597
    %v599 = vrot.slane %v583, %v598
    %v605 = vcombine.high %v499, %v499
    %v607 = vmul.f32 %v587, %v499
    %v608 = vmul.f32 %v591, %v605
    %v609 = vmul.f32 %v595, %v499
    %v610 = vmul.f32 %v599, %v605
    %v611 = vsub.f32 %v535, %v607
    %v612 = vsub.f32 %v536, %v608
    %v613 = vsub.f32 %v537, %v609
    %v614 = vsub.f32 %v538, %v610
    %v615 = vadd.f32 %v480, %v611
    %v616 = vadd.f32 %v481, %v612
    %v617 = vadd.f32 %v482, %v613
    %v618 = vadd.f32 %v483, %v614
    %v619 = vadd.f32 %v535, %v571
    %v620 = vadd.f32 %v536, %v572
    %v621 = vadd.f32 %v537, %v573
    %v622 = vadd.f32 %v538, %v574
    %v623 = vadd.f32 %v488, %v619
    %v624 = vadd.f32 %v489, %v620
    %v625 = vadd.f32 %v490, %v621
    %v626 = vadd.f32 %v491, %v622
    %v631 = vcombine.low %v615, %v616
    %v632 = vcombine.low %v617, %v618
    %635 = vst [vmem:[#allocation11] sm:$0xff] %v631
    %636 = vst [vmem:[#allocation11 + $0x8] sm:$0xff] %v632
    %v641 = vcombine.low %v623, %v624
    %v642 = vcombine.low %v625, %v626
    %645 = vst [vmem:[#allocation12] sm:$0xff] %v641
    %646 = vst [vmem:[#allocation12 + $0x8] sm:$0xff] %v642
    // Predicated region
    $region42: #{tpu_custom_call.1} parent=1 // pred_check
      _
    $region43: #{tpu_custom_call.1} parent=1 // pred_check_branch
      %648 = sbr.rel (0) target = $region45
    $region44: #{tpu_custom_call.1} parent=1 // pred_region
      %s650 = ssub.s32 256, 256
      %651 = vsyncadd [#allocation4], %s650
      %s652 = sshll.u32 [#allocation11], 4
      %s653 = int_to_ptr.vmem [resolvable:$true] %s652
      %658 = dma.vmem_to_hbm [thread:$0]  %s653, 256, %s5, [#allocation4], 128, 128, 8
    $region45: #{tpu_custom_call.1} parent=1 // pred_fallthru
      _
    // Predicated region
    $region46: #{tpu_custom_call.1} parent=1 // pred_check
      _
    $region47: #{tpu_custom_call.1} parent=1 // pred_check_branch
      %660 = sbr.rel (0) target = $region49
    $region48: #{tpu_custom_call.1} parent=1 // pred_region
      %s662 = ssub.s32 256, 256
      %663 = vsyncadd [#allocation13], %s662
      %s664 = sshll.u32 [#allocation12], 4
      %s665 = int_to_ptr.vmem [resolvable:$true] %s664
      %670 = dma.vmem_to_hbm [thread:$0]  %s665, 256, %s6, [#allocation13], 128, 128, 8
    $region49: #{tpu_custom_call.1} parent=1 // pred_fallthru
      _
    // Predicated region
    $region50: #{tpu_custom_call.1} parent=1 // pred_check
      _
    $region51: #{tpu_custom_call.1} parent=1 // pred_check_branch
      %672 = sbr.rel (0) target = $region53
    $region52: #{tpu_custom_call.1} parent=1 // pred_region
      %673 = dma.done [#allocation4], 256
    $region53: #{tpu_custom_call.1} parent=1 // pred_fallthru
      _
    // Predicated region
    $region54: #{tpu_custom_call.1} parent=1 // pred_check
      _
    $region55: #{tpu_custom_call.1} parent=1 // pred_check_branch
      %675 = sbr.rel (0) target = $region57
    $region56: #{tpu_custom_call.1} parent=1 // pred_region
      %676 = dma.done [#allocation13], 256
    $region57: #{tpu_custom_call.1} parent=1 // pred_fallthru
      _
    %677 = vsyncpa [#allocation3], 1
    %678 = vsyncpa [#allocation6], 1
    %679 = vsyncpa [#allocation9], 1
    %680 = vsyncpa [#allocation4], 1
    %681 = vsyncpa [#allocation13], 1

</llo_original>
